<compile_context>
chip_gen: v7x
topology: tpu7x:2x2x1
jax: 0.10.0
libtpu: 0.0.40
codegen_flags: <defaults>
</compile_context>

<pallas_src>
import functools

import jax
import jax.numpy as jnp
from jax.experimental import pallas as pl
from jax.experimental.pallas import tpu as pltpu

_BLOCK_BUDGET_BYTES = 8 * 1024 * 1024     # one (2, tile_n, tile_d) input block
_VMEM_LIMIT_BYTES = 32 * 1024 * 1024      # explicit scoped-VMEM limit (all gens)


def _l1_repr_kernel(x_ref, o_ref,
                    l1_acc, s0_acc, ss0_acc, s1_acc, ss1_acc,
                    *, inv_nd, inv_d, inv_n, inv_nm1, acc_rows):
    """Streams N tiles for one D tile; writes a per-D-tile partial row."""
    n_step = pl.program_id(1)

    @pl.when(n_step == 0)
    def _init():
        l1_acc[...] = jnp.zeros_like(l1_acc)
        s0_acc[...] = jnp.zeros_like(s0_acc)
        ss0_acc[...] = jnp.zeros_like(ss0_acc)
        s1_acc[...] = jnp.zeros_like(s1_acc)
        ss1_acc[...] = jnp.zeros_like(ss1_acc)

    x0 = x_ref[0].astype(jnp.float32)   # (tile_n, tile_d)
    x1 = x_ref[1].astype(jnp.float32)
    tn, td = x0.shape

    if acc_rows == 8:
        # Pure vreg-wise VPU adds in the hot loop; no cross-sublane reduce.
        def colsum(v):
            return jnp.sum(v.reshape(tn // 8, 8, td), axis=0)
    else:
        def colsum(v):
            return jnp.sum(v, axis=0, keepdims=True)

    l1_acc[...] += colsum(jnp.abs(x0 - x1))
    s0_acc[...] += colsum(x0)
    ss0_acc[...] += colsum(x0 * x0)
    s1_acc[...] += colsum(x1)
    ss1_acc[...] += colsum(x1 * x1)

    @pl.when(n_step == pl.num_programs(1) - 1)
    def _finalize():
        # Final 8 -> 1 sublane reduce happens only once per D tile.
        l1 = jnp.sum(l1_acc[...], axis=0, keepdims=True)
        s0 = jnp.sum(s0_acc[...], axis=0, keepdims=True)
        ss0 = jnp.sum(ss0_acc[...], axis=0, keepdims=True)
        s1 = jnp.sum(s1_acc[...], axis=0, keepdims=True)
        ss1 = jnp.sum(ss1_acc[...], axis=0, keepdims=True)
        # unbiased var = (sum(x^2) - sum(x)^2 / N) / (N - 1), per feature column.
        # TODO(synk): streaming E[x^2]-E[x]^2 can cancel for mean >> std inputs;
        # add a per-tile shift (or Welford) if such inputs matter.
        var0 = (ss0 - s0 * s0 * inv_n) * inv_nm1
        var1 = (ss1 - s1 * s1 * inv_n) * inv_nm1
        clamp0 = jnp.maximum(1.0 - var0, 0.0)
        clamp1 = jnp.maximum(1.0 - var1, 0.0)
        # Partial of the final scalar with GLOBAL normalizers baked in;
        # the wrapper sums over D.
        o_ref[...] = l1 * inv_nd + (clamp0 + clamp1) * inv_d


def _pick_tile(dim: int, align: int, max_tile: int) -> int:
    # Block dims must be a multiple of `align` (8 sublanes / 128 lanes) or
    # equal to the full array dim.
    if dim <= align or dim % align != 0:
        return dim
    t = max(align, (min(max_tile, dim) // align) * align)
    while dim % t != 0:
        t -= align
    return t


def _has_two_tensorcores() -> bool:
    try:
        kind = jax.devices()[0].device_kind.lower()
    except Exception:  # pragma: no cover - defensive
        return False
    return "v7" in kind or "7x" in kind


def _select_tiles(N: int, D: int, itemsize: int,
                  max_tile_n, max_tile_d):
    two_core = _has_two_tensorcores()
    # tile_d: v7x wants >= 2 blocks along the parallel D axis; single-TC chips
    # want full-D contiguous rows (up to 2048 lanes).
    if max_tile_d is not None:
        cap_d = max_tile_d
    elif two_core and D >= 256 and D % 128 == 0:
        cap_d = max(128, ((D // 2) // 128) * 128)
    else:
        cap_d = 2048
    tile_d = _pick_tile(D, 128, cap_d)

    # tile_n: grow until one (2, tile_n, tile_d) block hits the budget.
    if max_tile_n is not None:
        cap_n = max_tile_n
    else:
        cap_n = max(8, _BLOCK_BUDGET_BYTES // (2 * tile_d * itemsize))
        cap_n = min(cap_n, 2048)
    tile_n = _pick_tile(N, 8, cap_n)
    return tile_n, tile_d


def l1_loss_representation(output: jax.Array, *,
                           max_tile_n: int | None = None,
                           max_tile_d: int | None = None) -> jax.Array:
    """output: (R>=2, N, D) array; returns scalar f32 loss."""
    assert output.ndim == 3 and output.shape[0] >= 2, (
        "need (R>=2, N, D) with two representations along axis 0")
    _, N, D = output.shape
    assert N >= 2, "unbiased variance (torch.var default) requires N >= 2"

    itemsize = jnp.dtype(output.dtype).itemsize
    tile_n, tile_d = _select_tiles(N, D, itemsize, max_tile_n, max_tile_d)
    grid = (D // tile_d, N // tile_n)
    acc_rows = 8 if tile_n % 8 == 0 else 1

    kernel = functools.partial(
        _l1_repr_kernel,
        inv_nd=1.0 / float(N * D),
        inv_d=1.0 / float(D),
        inv_n=1.0 / float(N),
        inv_nm1=1.0 / float(N - 1),
        acc_rows=acc_rows,
    )

    partials = pl.pallas_call(
        kernel,
        out_shape=jax.ShapeDtypeStruct((1, D), jnp.float32),
        grid=grid,
        in_specs=[
            # Single operand, single DMA per step: both representations in one
            # (2, tile_n, tile_d) block (first-axis block index pinned to 0).
            pl.BlockSpec((2, tile_n, tile_d), lambda d, n: (0, n, d)),
        ],
        out_specs=pl.BlockSpec((1, tile_d), lambda d, n: (0, d)),
        scratch_shapes=[pltpu.VMEM((acc_rows, tile_d), jnp.float32)
                        for _ in range(5)],
        compiler_params=pltpu.CompilerParams(
            dimension_semantics=("parallel", "arbitrary"),
            vmem_limit_bytes=_VMEM_LIMIT_BYTES),
        cost_estimate=pl.CostEstimate(
            flops=9 * N * D,
            transcendentals=0,
            bytes_accessed=2 * N * D * itemsize + 4 * D),
    )(output)

    return jnp.sum(partials)


def _reference(output: jax.Array) -> jax.Array:
    x0 = output[0].astype(jnp.float32)
    x1 = output[1].astype(jnp.float32)
    l1 = jnp.mean(jnp.abs(x0 - x1))

    def v(x):
        var = jnp.var(x, axis=0, ddof=1)
        return jnp.mean(jnp.maximum(1.0 - var, 0.0))

    return l1 + v(x0) + v(x1)


if __name__ == "__main__":
    key = jax.random.PRNGKey(0)
    # (2 representations, batch N=64, feature dim D=256)
    output = jax.random.normal(key, (2, 64, 256), dtype=jnp.float32)

    ref = _reference(output)

    # Auto tile choice (single N step at this small size).
    loss = jax.block_until_ready(jax.jit(l1_loss_representation)(output))
    assert jnp.allclose(loss, ref, rtol=2e-5, atol=2e-5), (loss, ref)

    # Small forced tiles to exercise the multi-step streaming reduction and the
    # D-parallel partial-output path: grid = (256/128, 64/16) = (2, 4).
    small_fn = jax.jit(functools.partial(
        l1_loss_representation, max_tile_n=16, max_tile_d=128))
    loss_small = jax.block_until_ready(small_fn(output))
    assert jnp.allclose(loss_small, ref, rtol=2e-5, atol=2e-5), (loss_small, ref)

    print("KERNEL_OK")
</pallas_src>

<mosaic_0001>
module attributes {stable_mosaic.version = 11 : i64} {
  func.func @_l1_repr_kernel(%arg0: i32, %arg1: i32, %arg2: memref<2x64x256xf32, #tpu.memory_space<vmem>>, %arg3: memref<1x256xf32, #tpu.memory_space<vmem>>, %arg4: memref<8x256xf32, #tpu.memory_space<vmem>>, %arg5: memref<8x256xf32, #tpu.memory_space<vmem>>, %arg6: memref<8x256xf32, #tpu.memory_space<vmem>>, %arg7: memref<8x256xf32, #tpu.memory_space<vmem>>, %arg8: memref<8x256xf32, #tpu.memory_space<vmem>>) attributes {dimension_semantics = [#tpu.dimension_semantics<parallel>, #tpu.dimension_semantics<arbitrary>], iteration_bounds = array<i64: 1, 1>, scalar_prefetch = 0 : i64, scratch_operands = 5 : i64, tpu.core_type = #tpu.core_type<tc>, window_params = [{transform_indices = @transform_0, window_bounds = array<i64: 2, 64, 256>}, {transform_indices = @transform_1, window_bounds = array<i64: 1, 256>}]} {
    %c0_i32 = arith.constant 0 : i32
    %0 = arith.cmpi eq, %arg1, %c0_i32 : i32
    %1 = arith.extui %0 : i1 to i32
    %c0_i32_0 = arith.constant 0 : i32
    %2 = arith.cmpi ne, %1, %c0_i32_0 : i32
    scf.if %2 {
      %cst_31 = arith.constant 0.000000e+00 : f32
      %39 = vector.broadcast %cst_31 : f32 to vector<8x256xf32>
      %c0_32 = arith.constant 0 : index
      %c0_33 = arith.constant 0 : index
      %40 = vector.load %arg4[%c0_32, %c0_33] : memref<8x256xf32, #tpu.memory_space<vmem>>, vector<8x256xf32>
      tpu.vector_store %arg4[%c0_32, %c0_33], %39 {strides = array<i32>} : memref<8x256xf32, #tpu.memory_space<vmem>>, vector<8x256xf32>,
      %cst_34 = arith.constant 0.000000e+00 : f32
      %41 = vector.broadcast %cst_34 : f32 to vector<8x256xf32>
      %c0_35 = arith.constant 0 : index
      %c0_36 = arith.constant 0 : index
      %42 = vector.load %arg5[%c0_35, %c0_36] : memref<8x256xf32, #tpu.memory_space<vmem>>, vector<8x256xf32>
      tpu.vector_store %arg5[%c0_35, %c0_36], %41 {strides = array<i32>} : memref<8x256xf32, #tpu.memory_space<vmem>>, vector<8x256xf32>,
      %cst_37 = arith.constant 0.000000e+00 : f32
      %43 = vector.broadcast %cst_37 : f32 to vector<8x256xf32>
      %c0_38 = arith.constant 0 : index
      %c0_39 = arith.constant 0 : index
      %44 = vector.load %arg6[%c0_38, %c0_39] : memref<8x256xf32, #tpu.memory_space<vmem>>, vector<8x256xf32>
      tpu.vector_store %arg6[%c0_38, %c0_39], %43 {strides = array<i32>} : memref<8x256xf32, #tpu.memory_space<vmem>>, vector<8x256xf32>,
      %cst_40 = arith.constant 0.000000e+00 : f32
      %45 = vector.broadcast %cst_40 : f32 to vector<8x256xf32>
      %c0_41 = arith.constant 0 : index
      %c0_42 = arith.constant 0 : index
      %46 = vector.load %arg7[%c0_41, %c0_42] : memref<8x256xf32, #tpu.memory_space<vmem>>, vector<8x256xf32>
      tpu.vector_store %arg7[%c0_41, %c0_42], %45 {strides = array<i32>} : memref<8x256xf32, #tpu.memory_space<vmem>>, vector<8x256xf32>,
      %cst_43 = arith.constant 0.000000e+00 : f32
      %47 = vector.broadcast %cst_43 : f32 to vector<8x256xf32>
      %c0_44 = arith.constant 0 : index
      %c0_45 = arith.constant 0 : index
      %48 = vector.load %arg8[%c0_44, %c0_45] : memref<8x256xf32, #tpu.memory_space<vmem>>, vector<8x256xf32>
      tpu.vector_store %arg8[%c0_44, %c0_45], %47 {strides = array<i32>} : memref<8x256xf32, #tpu.memory_space<vmem>>, vector<8x256xf32>,
    } else {
    }
    %c0 = arith.constant 0 : index
    %c0_1 = arith.constant 0 : index
    %c0_2 = arith.constant 0 : index
    %3 = vector.load %arg2[%c0, %c0_1, %c0_2] : memref<2x64x256xf32, #tpu.memory_space<vmem>>, vector<1x64x256xf32>
    %4 = vector.shape_cast %3 : vector<1x64x256xf32> to vector<64x256xf32>
    %c1 = arith.constant 1 : index
    %c0_3 = arith.constant 0 : index
    %c0_4 = arith.constant 0 : index
    %5 = vector.load %arg2[%c1, %c0_3, %c0_4] : memref<2x64x256xf32, #tpu.memory_space<vmem>>, vector<1x64x256xf32>
    %6 = vector.shape_cast %5 : vector<1x64x256xf32> to vector<64x256xf32>
    %c0_5 = arith.constant 0 : index
    %c0_6 = arith.constant 0 : index
    %7 = vector.load %arg4[%c0_5, %c0_6] : memref<8x256xf32, #tpu.memory_space<vmem>>, vector<8x256xf32>
    %8 = arith.subf %4, %6 : vector<64x256xf32>
    %9 = math.absf %8 : vector<64x256xf32>
    %10 = vector.shape_cast %9 : vector<64x256xf32> to vector<8x8x256xf32>
    %cst = arith.constant dense<0.000000e+00> : vector<8x256xf32>
    %11 = vector.multi_reduction <add>, %10, %cst [0] : vector<8x8x256xf32> to vector<8x256xf32>
    %12 = arith.addf %7, %11 : vector<8x256xf32>
    %c0_7 = arith.constant 0 : index
    %c0_8 = arith.constant 0 : index
    %13 = vector.load %arg4[%c0_7, %c0_8] : memref<8x256xf32, #tpu.memory_space<vmem>>, vector<8x256xf32>
    tpu.vector_store %arg4[%c0_7, %c0_8], %12 {strides = array<i32>} : memref<8x256xf32, #tpu.memory_space<vmem>>, vector<8x256xf32>,
    %c0_9 = arith.constant 0 : index
    %c0_10 = arith.constant 0 : index
    %14 = vector.load %arg5[%c0_9, %c0_10] : memref<8x256xf32, #tpu.memory_space<vmem>>, vector<8x256xf32>
    %15 = vector.shape_cast %4 : vector<64x256xf32> to vector<8x8x256xf32>
    %cst_11 = arith.constant dense<0.000000e+00> : vector<8x256xf32>
    %16 = vector.multi_reduction <add>, %15, %cst_11 [0] : vector<8x8x256xf32> to vector<8x256xf32>
    %17 = arith.addf %14, %16 : vector<8x256xf32>
    %c0_12 = arith.constant 0 : index
    %c0_13 = arith.constant 0 : index
    %18 = vector.load %arg5[%c0_12, %c0_13] : memref<8x256xf32, #tpu.memory_space<vmem>>, vector<8x256xf32>
    tpu.vector_store %arg5[%c0_12, %c0_13], %17 {strides = array<i32>} : memref<8x256xf32, #tpu.memory_space<vmem>>, vector<8x256xf32>,
    %c0_14 = arith.constant 0 : index
    %c0_15 = arith.constant 0 : index
    %19 = vector.load %arg6[%c0_14, %c0_15] : memref<8x256xf32, #tpu.memory_space<vmem>>, vector<8x256xf32>
    %20 = arith.mulf %4, %4 : vector<64x256xf32>
    %21 = vector.shape_cast %20 : vector<64x256xf32> to vector<8x8x256xf32>
    %cst_16 = arith.constant dense<0.000000e+00> : vector<8x256xf32>
    %22 = vector.multi_reduction <add>, %21, %cst_16 [0] : vector<8x8x256xf32> to vector<8x256xf32>
    %23 = arith.addf %19, %22 : vector<8x256xf32>
    %c0_17 = arith.constant 0 : index
    %c0_18 = arith.constant 0 : index
    %24 = vector.load %arg6[%c0_17, %c0_18] : memref<8x256xf32, #tpu.memory_space<vmem>>, vector<8x256xf32>
    tpu.vector_store %arg6[%c0_17, %c0_18], %23 {strides = array<i32>} : memref<8x256xf32, #tpu.memory_space<vmem>>, vector<8x256xf32>,
    %c0_19 = arith.constant 0 : index
    %c0_20 = arith.constant 0 : index
    %25 = vector.load %arg7[%c0_19, %c0_20] : memref<8x256xf32, #tpu.memory_space<vmem>>, vector<8x256xf32>
    %26 = vector.shape_cast %6 : vector<64x256xf32> to vector<8x8x256xf32>
    %cst_21 = arith.constant dense<0.000000e+00> : vector<8x256xf32>
    %27 = vector.multi_reduction <add>, %26, %cst_21 [0] : vector<8x8x256xf32> to vector<8x256xf32>
    %28 = arith.addf %25, %27 : vector<8x256xf32>
    %c0_22 = arith.constant 0 : index
    %c0_23 = arith.constant 0 : index
    %29 = vector.load %arg7[%c0_22, %c0_23] : memref<8x256xf32, #tpu.memory_space<vmem>>, vector<8x256xf32>
    tpu.vector_store %arg7[%c0_22, %c0_23], %28 {strides = array<i32>} : memref<8x256xf32, #tpu.memory_space<vmem>>, vector<8x256xf32>,
    %c0_24 = arith.constant 0 : index
    %c0_25 = arith.constant 0 : index
    %30 = vector.load %arg8[%c0_24, %c0_25] : memref<8x256xf32, #tpu.memory_space<vmem>>, vector<8x256xf32>
    %31 = arith.mulf %6, %6 : vector<64x256xf32>
    %32 = vector.shape_cast %31 : vector<64x256xf32> to vector<8x8x256xf32>
    %cst_26 = arith.constant dense<0.000000e+00> : vector<8x256xf32>
    %33 = vector.multi_reduction <add>, %32, %cst_26 [0] : vector<8x8x256xf32> to vector<8x256xf32>
    %34 = arith.addf %30, %33 : vector<8x256xf32>
    %c0_27 = arith.constant 0 : index
    %c0_28 = arith.constant 0 : index
    %35 = vector.load %arg8[%c0_27, %c0_28] : memref<8x256xf32, #tpu.memory_space<vmem>>, vector<8x256xf32>
    tpu.vector_store %arg8[%c0_27, %c0_28], %34 {strides = array<i32>} : memref<8x256xf32, #tpu.memory_space<vmem>>, vector<8x256xf32>,
    %c0_i32_29 = arith.constant 0 : i32
    %36 = arith.cmpi eq, %arg1, %c0_i32_29 : i32
    %37 = arith.extui %36 : i1 to i32
    %c0_i32_30 = arith.constant 0 : i32
    %38 = arith.cmpi ne, %37, %c0_i32_30 : i32
    scf.if %38 {
      %c0_31 = arith.constant 0 : index
      %c0_32 = arith.constant 0 : index
      %39 = vector.load %arg4[%c0_31, %c0_32] : memref<8x256xf32, #tpu.memory_space<vmem>>, vector<8x256xf32>
      %cst_33 = arith.constant dense<0.000000e+00> : vector<256xf32>
      %40 = vector.multi_reduction <add>, %39, %cst_33 [0] : vector<8x256xf32> to vector<256xf32>
      %41 = vector.shape_cast %40 : vector<256xf32> to vector<1x256xf32>
      %c0_34 = arith.constant 0 : index
      %c0_35 = arith.constant 0 : index
      %42 = vector.load %arg5[%c0_34, %c0_35] : memref<8x256xf32, #tpu.memory_space<vmem>>, vector<8x256xf32>
      %cst_36 = arith.constant dense<0.000000e+00> : vector<256xf32>
      %43 = vector.multi_reduction <add>, %42, %cst_36 [0] : vector<8x256xf32> to vector<256xf32>
      %44 = vector.shape_cast %43 : vector<256xf32> to vector<1x256xf32>
      %c0_37 = arith.constant 0 : index
      %c0_38 = arith.constant 0 : index
      %45 = vector.load %arg6[%c0_37, %c0_38] : memref<8x256xf32, #tpu.memory_space<vmem>>, vector<8x256xf32>
      %cst_39 = arith.constant dense<0.000000e+00> : vector<256xf32>
      %46 = vector.multi_reduction <add>, %45, %cst_39 [0] : vector<8x256xf32> to vector<256xf32>
      %47 = vector.shape_cast %46 : vector<256xf32> to vector<1x256xf32>
      %c0_40 = arith.constant 0 : index
      %c0_41 = arith.constant 0 : index
      %48 = vector.load %arg7[%c0_40, %c0_41] : memref<8x256xf32, #tpu.memory_space<vmem>>, vector<8x256xf32>
      %cst_42 = arith.constant dense<0.000000e+00> : vector<256xf32>
      %49 = vector.multi_reduction <add>, %48, %cst_42 [0] : vector<8x256xf32> to vector<256xf32>
      %50 = vector.shape_cast %49 : vector<256xf32> to vector<1x256xf32>
      %c0_43 = arith.constant 0 : index
      %c0_44 = arith.constant 0 : index
      %51 = vector.load %arg8[%c0_43, %c0_44] : memref<8x256xf32, #tpu.memory_space<vmem>>, vector<8x256xf32>
      %cst_45 = arith.constant dense<0.000000e+00> : vector<256xf32>
      %52 = vector.multi_reduction <add>, %51, %cst_45 [0] : vector<8x256xf32> to vector<256xf32>
      %53 = vector.shape_cast %52 : vector<256xf32> to vector<1x256xf32>
      %54 = arith.mulf %44, %44 : vector<1x256xf32>
      %cst_46 = arith.constant 1.562500e-02 : f32
      %55 = vector.broadcast %cst_46 : f32 to vector<1x256xf32>
      %56 = arith.mulf %54, %55 : vector<1x256xf32>
      %57 = arith.subf %47, %56 : vector<1x256xf32>
      %cst_47 = arith.constant 0.0158730168 : f32
      %58 = vector.broadcast %cst_47 : f32 to vector<1x256xf32>
      %59 = arith.mulf %57, %58 : vector<1x256xf32>
      %60 = arith.mulf %50, %50 : vector<1x256xf32>
      %cst_48 = arith.constant 1.562500e-02 : f32
      %61 = vector.broadcast %cst_48 : f32 to vector<1x256xf32>
      %62 = arith.mulf %60, %61 : vector<1x256xf32>
      %63 = arith.subf %53, %62 : vector<1x256xf32>
      %cst_49 = arith.constant 0.0158730168 : f32
      %64 = vector.broadcast %cst_49 : f32 to vector<1x256xf32>
      %65 = arith.mulf %63, %64 : vector<1x256xf32>
      %cst_50 = arith.constant 1.000000e+00 : f32
      %66 = vector.broadcast %cst_50 : f32 to vector<1x256xf32>
      %67 = arith.subf %66, %59 : vector<1x256xf32>
      %cst_51 = arith.constant 0.000000e+00 : f32
      %68 = vector.broadcast %cst_51 : f32 to vector<1x256xf32>
      %69 = arith.maximumf %67, %68 : vector<1x256xf32>
      %cst_52 = arith.constant 1.000000e+00 : f32
      %70 = vector.broadcast %cst_52 : f32 to vector<1x256xf32>
      %71 = arith.subf %70, %65 : vector<1x256xf32>
      %cst_53 = arith.constant 0.000000e+00 : f32
      %72 = vector.broadcast %cst_53 : f32 to vector<1x256xf32>
      %73 = arith.maximumf %71, %72 : vector<1x256xf32>
      %cst_54 = arith.constant 6.10351563E-5 : f32
      %74 = vector.broadcast %cst_54 : f32 to vector<1x256xf32>
      %75 = arith.mulf %41, %74 : vector<1x256xf32>
      %76 = arith.addf %69, %73 : vector<1x256xf32>
      %cst_55 = arith.constant 3.906250e-03 : f32
      %77 = vector.broadcast %cst_55 : f32 to vector<1x256xf32>
      %78 = arith.mulf %76, %77 : vector<1x256xf32>
      %79 = arith.addf %75, %78 : vector<1x256xf32>
      %c0_56 = arith.constant 0 : index
      %c0_57 = arith.constant 0 : index
      %80 = vector.load %arg3[%c0_56, %c0_57] : memref<1x256xf32, #tpu.memory_space<vmem>>, vector<1x256xf32>
      tpu.vector_store %arg3[%c0_56, %c0_57], %79 {strides = array<i32>} : memref<1x256xf32, #tpu.memory_space<vmem>>, vector<1x256xf32>,
    } else {
    }
    return
  }
  func.func @transform_0(%arg0: i32, %arg1: i32) -> (i32, i32, i32) {
    %c0_i32 = arith.constant 0 : i32
    %c0_i32_0 = arith.constant 0 : i32
    return %c0_i32, %arg1, %arg0 : i32, i32, i32
  }
  func.func @transform_1(%arg0: i32, %arg1: i32) -> (i32, i32) {
    %c0_i32 = arith.constant 0 : i32
    %c0_i32_0 = arith.constant 0 : i32
    return %c0_i32, %arg0 : i32, i32
  }
}

</mosaic_0001>

<llo_original>
// kernel: l1_loss_representation.1
$region0: #{l1_loss_representation.1}
  #allocation0 [shape = 'u32[]', space=smem, size = 0x4, offset = 0x4, fixed_abs, tag = 'smem constant byte address 0x4 - core index']
  #allocation1 [shape = 'u32[144,128]{1,0:T(1,128)}', space=vmem, size = 0x12000, scoped, tag = 'internal scratch']
  #allocation2 [shape = 'f32[8,256]{1,0:T(8,128)}', space=vmem, size = 0x2000, scoped, tag = 'scratch operand']
  #allocation3 [shape = 'f32[8,256]{1,0:T(8,128)}', space=vmem, size = 0x2000, scoped, tag = 'scratch operand']
  #allocation4 [shape = 'f32[8,256]{1,0:T(8,128)}', space=vmem, size = 0x2000, scoped, tag = 'scratch operand']
  #allocation5 [shape = 'f32[8,256]{1,0:T(8,128)}', space=vmem, size = 0x2000, scoped, tag = 'scratch operand']
  #allocation6 [shape = 'f32[8,256]{1,0:T(8,128)}', space=vmem, size = 0x2000, scoped, tag = 'scratch operand']
  %s0 = inlined_call_operand.hbm [shape: f32[2,64,256], index: 0, kind: input, shape index: {}]
  %s1 = inlined_call_operand.vmem [shape: f32[1,256], index: 1, kind: output, shape index: {}]
  %s2 = sld [smem:[#allocation0]]
  $region26: #{l1_loss_representation.1} parent=0
    _
  %s4 = ssub.s32 1, %s2
  %s5 = scalar_select 0, %s4, %s2
  $region1: #{l1_loss_representation.1} parent=0
    #allocation7 [shape = 'u8[131072]{0}', space=vmem, size = 0x20000, scoped, tag = 'input window, operand 0, single buffered']
    #allocation8 [shape = 's32[1]{0}', space=sflag, size = 0x4, scoped, tag = 'scoped memory for l1_loss_representation.1']
    %6 = vsyncpa [#allocation8], 0
    // Predicated region
    $region2: #{l1_loss_representation.1} parent=1 // pred_check
      _
    $region3: #{l1_loss_representation.1} parent=1 // pred_check_branch
      %8 = sbr.rel (0) target = $region5
    $region4: #{l1_loss_representation.1} parent=1 // pred_region
      %s10 = ssub.s32 4096, 4096
      %11 = vsyncadd [#allocation8], %s10
      %s12 = sshll.u32 [#allocation7], 4
      %s13 = int_to_ptr.vmem [resolvable:$true] %s12
      %18 = dma.hbm_to_vmem [thread:$0]  %s0, 4096, %s13, [#allocation8], 256, 256, 16
    $region5: #{l1_loss_representation.1} parent=1 // pred_fallthru
      _
    // Predicated region
    $region6: #{l1_loss_representation.1} parent=1 // pred_check
      _
    $region7: #{l1_loss_representation.1} parent=1 // pred_check_branch
      %20 = sbr.rel (0) target = $region9
    $region8: #{l1_loss_representation.1} parent=1 // pred_region
      %21 = dma.done [#allocation8], 4096
    $region9: #{l1_loss_representation.1} parent=1 // pred_fallthru
      _
    %p22 = scmp.eq.s32.totalorder 0, 0
    // Predicated region
    $region10: #{l1_loss_representation.1} parent=1 // pred_check
      %p23 = pneg %p22
    $region11: #{l1_loss_representation.1} parent=1 // pred_check_branch
      %25 = sbr.rel (%p23) target = $region13
    $region12: #{l1_loss_representation.1} parent=1 // pred_region
      %26 = vst [vmem:[#allocation2] sm:$0xff] 0.0
      %27 = vst [vmem:[#allocation2 + $0x8] sm:$0xff] 0.0
      %28 = vst [vmem:[#allocation3] sm:$0xff] 0.0
      %29 = vst [vmem:[#allocation3 + $0x8] sm:$0xff] 0.0
      %30 = vst [vmem:[#allocation4] sm:$0xff] 0.0
      %31 = vst [vmem:[#allocation4 + $0x8] sm:$0xff] 0.0
      %32 = vst [vmem:[#allocation5] sm:$0xff] 0.0
      %33 = vst [vmem:[#allocation5 + $0x8] sm:$0xff] 0.0
      %34 = vst [vmem:[#allocation6] sm:$0xff] 0.0
      %35 = vst [vmem:[#allocation6 + $0x8] sm:$0xff] 0.0
    $region13: #{l1_loss_representation.1} parent=1 // pred_fallthru
      _
    %v36 = vld [vmem:[#allocation7] sm:$0xff]
    %v37 = vld [vmem:[#allocation7 + $0x8] sm:$0xff]
    %v38 = vld [vmem:[#allocation7 + $0x10] sm:$0xff]
    %v39 = vld [vmem:[#allocation7 + $0x18] sm:$0xff]
    %v40 = vld [vmem:[#allocation7 + $0x20] sm:$0xff]
    %v41 = vld [vmem:[#allocation7 + $0x28] sm:$0xff]
    %v42 = vld [vmem:[#allocation7 + $0x30] sm:$0xff]
    %v43 = vld [vmem:[#allocation7 + $0x38] sm:$0xff]
    %v44 = vld [vmem:[#allocation7 + $0x40] sm:$0xff]
    %v45 = vld [vmem:[#allocation7 + $0x48] sm:$0xff]
    %v46 = vld [vmem:[#allocation7 + $0x50] sm:$0xff]
    %v47 = vld [vmem:[#allocation7 + $0x58] sm:$0xff]
    %v48 = vld [vmem:[#allocation7 + $0x60] sm:$0xff]
    %v49 = vld [vmem:[#allocation7 + $0x68] sm:$0xff]
    %v50 = vld [vmem:[#allocation7 + $0x70] sm:$0xff]
    %v51 = vld [vmem:[#allocation7 + $0x78] sm:$0xff]
    %s52 = scalar_lea.vmem [#allocation7], 128
    %v53 = vld [vmem:[%s52] sm:$0xff]
    %v54 = vld [vmem:[%s52 + $0x8] sm:$0xff]
    %v55 = vld [vmem:[%s52 + $0x10] sm:$0xff]
    %v56 = vld [vmem:[%s52 + $0x18] sm:$0xff]
    %v57 = vld [vmem:[%s52 + $0x20] sm:$0xff]
    %v58 = vld [vmem:[%s52 + $0x28] sm:$0xff]
    %v59 = vld [vmem:[%s52 + $0x30] sm:$0xff]
    %v60 = vld [vmem:[%s52 + $0x38] sm:$0xff]
    %v61 = vld [vmem:[%s52 + $0x40] sm:$0xff]
    %v62 = vld [vmem:[%s52 + $0x48] sm:$0xff]
    %v63 = vld [vmem:[%s52 + $0x50] sm:$0xff]
    %v64 = vld [vmem:[%s52 + $0x58] sm:$0xff]
    %v65 = vld [vmem:[%s52 + $0x60] sm:$0xff]
    %v66 = vld [vmem:[%s52 + $0x68] sm:$0xff]
    %v67 = vld [vmem:[%s52 + $0x70] sm:$0xff]
    %v68 = vld [vmem:[%s52 + $0x78] sm:$0xff]
    %v69 = vld [vmem:[#allocation2] sm:$0xff]
    %v70 = vld [vmem:[#allocation2 + $0x8] sm:$0xff]
    %v71 = vsub.f32 %v36, %v53
    %v72 = vsub.f32 %v37, %v54
    %v73 = vsub.f32 %v38, %v55
    %v74 = vsub.f32 %v39, %v56
    %v75 = vsub.f32 %v40, %v57
    %v76 = vsub.f32 %v41, %v58
    %v77 = vsub.f32 %v42, %v59
    %v78 = vsub.f32 %v43, %v60
    %v79 = vsub.f32 %v44, %v61
    %v80 = vsub.f32 %v45, %v62
    %v81 = vsub.f32 %v46, %v63
    %v82 = vsub.f32 %v47, %v64
    %v83 = vsub.f32 %v48, %v65
    %v84 = vsub.f32 %v49, %v66
    %v85 = vsub.f32 %v50, %v67
    %v86 = vsub.f32 %v51, %v68
    %v87 = vand.u32 2147483647, %v71
    %v88 = vand.u32 2147483647, %v72
    %v89 = vand.u32 2147483647, %v73
    %v90 = vand.u32 2147483647, %v74
    %v91 = vand.u32 2147483647, %v75
    %v92 = vand.u32 2147483647, %v76
    %v93 = vand.u32 2147483647, %v77
    %v94 = vand.u32 2147483647, %v78
    %v95 = vand.u32 2147483647, %v79
    %v96 = vand.u32 2147483647, %v80
    %v97 = vand.u32 2147483647, %v81
    %v98 = vand.u32 2147483647, %v82
    %v99 = vand.u32 2147483647, %v83
    %v100 = vand.u32 2147483647, %v84
    %v101 = vand.u32 2147483647, %v85
    %v102 = vand.u32 2147483647, %v86
    %v103 = vadd.f32 %v87, %v89
    %v104 = vadd.f32 %v103, %v91
    %v105 = vadd.f32 %v104, %v93
    %v106 = vadd.f32 %v105, %v95
    %v107 = vadd.f32 %v106, %v97
    %v108 = vadd.f32 %v107, %v99
    %v109 = vadd.f32 %v108, %v101
    %v110 = vadd.f32 %v88, %v90
    %v111 = vadd.f32 %v110, %v92
    %v112 = vadd.f32 %v111, %v94
    %v113 = vadd.f32 %v112, %v96
    %v114 = vadd.f32 %v113, %v98
    %v115 = vadd.f32 %v114, %v100
    %v116 = vadd.f32 %v115, %v102
    %v117 = vadd.f32 %v69, %v109
    %v118 = vadd.f32 %v70, %v116
    %119 = vst [vmem:[#allocation2] sm:$0xff] %v117
    %120 = vst [vmem:[#allocation2 + $0x8] sm:$0xff] %v118
    %v121 = vld [vmem:[#allocation3] sm:$0xff]
    %v122 = vld [vmem:[#allocation3 + $0x8] sm:$0xff]
    %v123 = vadd.f32 %v36, %v38
    %v124 = vadd.f32 %v123, %v40
    %v125 = vadd.f32 %v124, %v42
    %v126 = vadd.f32 %v125, %v44
    %v127 = vadd.f32 %v126, %v46
    %v128 = vadd.f32 %v127, %v48
    %v129 = vadd.f32 %v128, %v50
    %v130 = vadd.f32 %v37, %v39
    %v131 = vadd.f32 %v130, %v41
    %v132 = vadd.f32 %v131, %v43
    %v133 = vadd.f32 %v132, %v45
    %v134 = vadd.f32 %v133, %v47
    %v135 = vadd.f32 %v134, %v49
    %v136 = vadd.f32 %v135, %v51
    %v137 = vadd.f32 %v121, %v129
    %v138 = vadd.f32 %v122, %v136
    %139 = vst [vmem:[#allocation3] sm:$0xff] %v137
    %140 = vst [vmem:[#allocation3 + $0x8] sm:$0xff] %v138
    %v141 = vld [vmem:[#allocation4] sm:$0xff]
    %v142 = vld [vmem:[#allocation4 + $0x8] sm:$0xff]
    %v143 = vmul.f32 %v36, %v36
    %v144 = vmul.f32 %v37, %v37
    %v145 = vmul.f32 %v38, %v38
    %v146 = vmul.f32 %v39, %v39
    %v147 = vmul.f32 %v40, %v40
    %v148 = vmul.f32 %v41, %v41
    %v149 = vmul.f32 %v42, %v42
    %v150 = vmul.f32 %v43, %v43
    %v151 = vmul.f32 %v44, %v44
    %v152 = vmul.f32 %v45, %v45
    %v153 = vmul.f32 %v46, %v46
    %v154 = vmul.f32 %v47, %v47
    %v155 = vmul.f32 %v48, %v48
    %v156 = vmul.f32 %v49, %v49
    %v157 = vmul.f32 %v50, %v50
    %v158 = vmul.f32 %v51, %v51
    %v159 = vadd.f32 %v143, %v145
    %v160 = vadd.f32 %v159, %v147
    %v161 = vadd.f32 %v160, %v149
    %v162 = vadd.f32 %v161, %v151
    %v163 = vadd.f32 %v162, %v153
    %v164 = vadd.f32 %v163, %v155
    %v165 = vadd.f32 %v164, %v157
    %v166 = vadd.f32 %v144, %v146
    %v167 = vadd.f32 %v166, %v148
    %v168 = vadd.f32 %v167, %v150
    %v169 = vadd.f32 %v168, %v152
    %v170 = vadd.f32 %v169, %v154
    %v171 = vadd.f32 %v170, %v156
    %v172 = vadd.f32 %v171, %v158
    %v173 = vadd.f32 %v141, %v165
    %v174 = vadd.f32 %v142, %v172
    %175 = vst [vmem:[#allocation4] sm:$0xff] %v173
    %176 = vst [vmem:[#allocation4 + $0x8] sm:$0xff] %v174
    %v177 = vld [vmem:[#allocation5] sm:$0xff]
    %v178 = vld [vmem:[#allocation5 + $0x8] sm:$0xff]
    %v179 = vadd.f32 %v53, %v55
    %v180 = vadd.f32 %v179, %v57
    %v181 = vadd.f32 %v180, %v59
    %v182 = vadd.f32 %v181, %v61
    %v183 = vadd.f32 %v182, %v63
    %v184 = vadd.f32 %v183, %v65
    %v185 = vadd.f32 %v184, %v67
    %v186 = vadd.f32 %v54, %v56
    %v187 = vadd.f32 %v186, %v58
    %v188 = vadd.f32 %v187, %v60
    %v189 = vadd.f32 %v188, %v62
    %v190 = vadd.f32 %v189, %v64
    %v191 = vadd.f32 %v190, %v66
    %v192 = vadd.f32 %v191, %v68
    %v193 = vadd.f32 %v177, %v185
    %v194 = vadd.f32 %v178, %v192
    %195 = vst [vmem:[#allocation5] sm:$0xff] %v193
    %196 = vst [vmem:[#allocation5 + $0x8] sm:$0xff] %v194
    %v197 = vld [vmem:[#allocation6] sm:$0xff]
    %v198 = vld [vmem:[#allocation6 + $0x8] sm:$0xff]
    %v199 = vmul.f32 %v53, %v53
    %v200 = vmul.f32 %v54, %v54
    %v201 = vmul.f32 %v55, %v55
    %v202 = vmul.f32 %v56, %v56
    %v203 = vmul.f32 %v57, %v57
    %v204 = vmul.f32 %v58, %v58
    %v205 = vmul.f32 %v59, %v59
    %v206 = vmul.f32 %v60, %v60
    %v207 = vmul.f32 %v61, %v61
    %v208 = vmul.f32 %v62, %v62
    %v209 = vmul.f32 %v63, %v63
    %v210 = vmul.f32 %v64, %v64
    %v211 = vmul.f32 %v65, %v65
    %v212 = vmul.f32 %v66, %v66
    %v213 = vmul.f32 %v67, %v67
    %v214 = vmul.f32 %v68, %v68
    %v215 = vadd.f32 %v199, %v201
    %v216 = vadd.f32 %v215, %v203
    %v217 = vadd.f32 %v216, %v205
    %v218 = vadd.f32 %v217, %v207
    %v219 = vadd.f32 %v218, %v209
    %v220 = vadd.f32 %v219, %v211
    %v221 = vadd.f32 %v220, %v213
    %v222 = vadd.f32 %v200, %v202
    %v223 = vadd.f32 %v222, %v204
    %v224 = vadd.f32 %v223, %v206
    %v225 = vadd.f32 %v224, %v208
    %v226 = vadd.f32 %v225, %v210
    %v227 = vadd.f32 %v226, %v212
    %v228 = vadd.f32 %v227, %v214
    %v229 = vadd.f32 %v197, %v221
    %v230 = vadd.f32 %v198, %v228
    %231 = vst [vmem:[#allocation6] sm:$0xff] %v229
    %232 = vst [vmem:[#allocation6 + $0x8] sm:$0xff] %v230
    // Predicated region
    $region14: #{l1_loss_representation.1} parent=1 // pred_check
      %p233 = pneg %p22
    $region15: #{l1_loss_representation.1} parent=1 // pred_check_branch
      %235 = sbr.rel (%p233) target = $region17
    $region16: #{l1_loss_representation.1} parent=1 // pred_region
      %v236 = vld [vmem:[#allocation2] sm:$0xff]
      %v237 = vld [vmem:[#allocation2 + $0x8] sm:$0xff]
      %v238 = vrot.slane %v236, 4
      %v239 = vadd.f32 %v236, %v238
      %v240 = vrot.slane %v239, 2
      %v241 = vadd.f32 %v239, %v240
      %v242 = vrot.slane %v241, 1
      %v243 = vadd.f32 %v241, %v242
      %v244 = vrot.slane %v237, 4
      %v245 = vadd.f32 %v237, %v244
      %v246 = vrot.slane %v245, 2
      %v247 = vadd.f32 %v245, %v246
      %v248 = vrot.slane %v247, 1
      %v249 = vadd.f32 %v247, %v248
      %v250 = vld [vmem:[#allocation3] sm:$0xff]
      %v251 = vld [vmem:[#allocation3 + $0x8] sm:$0xff]
      %v252 = vrot.slane %v250, 4
      %v253 = vadd.f32 %v250, %v252
      %v254 = vrot.slane %v253, 2
      %v255 = vadd.f32 %v253, %v254
      %v256 = vrot.slane %v255, 1
      %v257 = vadd.f32 %v255, %v256
      %v258 = vrot.slane %v251, 4
      %v259 = vadd.f32 %v251, %v258
      %v260 = vrot.slane %v259, 2
      %v261 = vadd.f32 %v259, %v260
      %v262 = vrot.slane %v261, 1
      %v263 = vadd.f32 %v261, %v262
      %v264 = vld [vmem:[#allocation4] sm:$0xff]
      %v265 = vld [vmem:[#allocation4 + $0x8] sm:$0xff]
      %v266 = vrot.slane %v264, 4
      %v267 = vadd.f32 %v264, %v266
      %v268 = vrot.slane %v267, 2
      %v269 = vadd.f32 %v267, %v268
      %v270 = vrot.slane %v269, 1
      %v271 = vadd.f32 %v269, %v270
      %v272 = vrot.slane %v265, 4
      %v273 = vadd.f32 %v265, %v272
      %v274 = vrot.slane %v273, 2
      %v275 = vadd.f32 %v273, %v274
      %v276 = vrot.slane %v275, 1
      %v277 = vadd.f32 %v275, %v276
      %v278 = vld [vmem:[#allocation5] sm:$0xff]
      %v279 = vld [vmem:[#allocation5 + $0x8] sm:$0xff]
      %v280 = vrot.slane %v278, 4
      %v281 = vadd.f32 %v278, %v280
      %v282 = vrot.slane %v281, 2
      %v283 = vadd.f32 %v281, %v282
      %v284 = vrot.slane %v283, 1
      %v285 = vadd.f32 %v283, %v284
      %v286 = vrot.slane %v279, 4
      %v287 = vadd.f32 %v279, %v286
      %v288 = vrot.slane %v287, 2
      %v289 = vadd.f32 %v287, %v288
      %v290 = vrot.slane %v289, 1
      %v291 = vadd.f32 %v289, %v290
      %v292 = vld [vmem:[#allocation6] sm:$0xff]
      %v293 = vld [vmem:[#allocation6 + $0x8] sm:$0xff]
      %v294 = vrot.slane %v292, 4
      %v295 = vadd.f32 %v292, %v294
      %v296 = vrot.slane %v295, 2
      %v297 = vadd.f32 %v295, %v296
      %v298 = vrot.slane %v297, 1
      %v299 = vadd.f32 %v297, %v298
      %v300 = vrot.slane %v293, 4
      %v301 = vadd.f32 %v293, %v300
      %v302 = vrot.slane %v301, 2
      %v303 = vadd.f32 %v301, %v302
      %v304 = vrot.slane %v303, 1
      %v305 = vadd.f32 %v303, %v304
      %v306 = vmul.f32 %v257, %v257
      %v307 = vmul.f32 %v263, %v263
      %v308 = vmul.f32 %v306, 0.015625
      %v309 = vmul.f32 %v307, 0.015625
      %v310 = vsub.f32 %v271, %v308
      %v311 = vsub.f32 %v277, %v309
      %v312 = vmul.f32 %v310, 0.015873017
      %v313 = vmul.f32 %v311, 0.015873017
      %v314 = vmul.f32 %v285, %v285
      %v315 = vmul.f32 %v291, %v291
      %v316 = vmul.f32 %v314, 0.015625
      %v317 = vmul.f32 %v315, 0.015625
      %v318 = vsub.f32 %v299, %v316
      %v319 = vsub.f32 %v305, %v317
      %v320 = vmul.f32 %v318, 0.015873017
      %v321 = vmul.f32 %v319, 0.015873017
      %v322 = vsub.f32 1.0, %v312
      %v323 = vsub.f32 1.0, %v313
      %v324 = vmax.f32 %v322, 0.0
      %v325 = vmax.f32 %v323, 0.0
      %v326 = vsub.f32 1.0, %v320
      %v327 = vsub.f32 1.0, %v321
      %v328 = vmax.f32 %v326, 0.0
      %v329 = vmax.f32 %v327, 0.0
      %v330 = vmul.f32 %v243, 6.1035156e-05
      %v331 = vmul.f32 %v249, 6.1035156e-05
      %v332 = vadd.f32 %v324, %v328
      %v333 = vadd.f32 %v325, %v329
      %v334 = vmul.f32 %v332, 0.00390625
      %v335 = vmul.f32 %v333, 0.00390625
      %v336 = vadd.f32 %v330, %v334
      %v337 = vadd.f32 %v331, %v335
      %v340 = vcombine.low %v336, %v337
      %v342 = vunpack.c.l.s4 1966171168
      %v343 = vunpack.c.0.s8 %v342
      %v344 = vlaneseq
      %v345 = vshrl.u32 %v344, 7
      %v346 = vsub.s32 %v343, %v345
      %v347 = vrot.slane %v340, %v346
      %v349 = vunpack.c.l.s4 1966171168
      %v350 = vunpack.c.0.s8 %v349
      %v351 = vlaneseq
      %v352 = vshrl.u32 %v351, 7
      %v353 = vsub.s32 %v350, %v352
      %v354 = vrot.slane %v347, %v353
      %v356 = vlaneseq
      %vm357 = vcmp.ge.s32.totalorder %v356, 0
      %vm358 = vcmp.lt.s32.totalorder %v356, 256
      %vm359 = vmand %vm357, %vm358
      %360 = vst.msk [vmem:[%s1] sm:$0x3] %vm359, %v354
    $region17: #{l1_loss_representation.1} parent=1 // pred_fallthru
      _
    // Predicated region
    $region18: #{l1_loss_representation.1} parent=1 // pred_check
      _
    $region19: #{l1_loss_representation.1} parent=1 // pred_check_branch
      %362 = sbr.rel (0) target = $region21
    $region20: #{l1_loss_representation.1} parent=1 // pred_region
      _
    $region21: #{l1_loss_representation.1} parent=1 // pred_fallthru
      _
    // Predicated region
    $region22: #{l1_loss_representation.1} parent=1 // pred_check
      _
    $region23: #{l1_loss_representation.1} parent=1 // pred_check_branch
      %364 = sbr.rel (0) target = $region25
    $region24: #{l1_loss_representation.1} parent=1 // pred_region
      _
    $region25: #{l1_loss_representation.1} parent=1 // pred_fallthru
      _
    %365 = vsyncpa [#allocation8], 1

</llo_original>
